<compile_context>
chip_gen: v5e
topology: v5e:2x2
jax: 0.10.0
libtpu: 0.0.40
codegen_flags: <defaults>
</compile_context>

<pallas_src>
import jax
import jax.numpy as jnp
from jax.experimental import pallas as pl
from jax.experimental.pallas import tpu as pltpu


QMAX = 255.0  # uint8


def _round_up(x, m):
    return ((x + m - 1) // m) * m


def _default_tiles():
    """Per-generation matmul tile defaults (tm, tn, tk)."""
    try:
        kind = jax.devices()[0].device_kind.lower()
    except Exception:  # pragma: no cover - defensive
        kind = ""
    if "v5 lite" in kind or "v5e" in kind or "v5litepod" in kind:
        # v5e: 4x128x128 MXU, ~820 GB/s HBM -> 512x512 output tiles are past the ridge.
        return 512, 512, 1024
    # v6e / v7x (and unknown): 2x256x256 MXU; 1024 tiles keep the MXU fed and fit
    # well under v7x's 64 MiB VMEM.
    return 1024, 1024, 1024


# --------------------------- quantization pre-pass ---------------------------

def _quant_kernel(params_ref, x_ref, q_ref):
    # params_ref (SMEM, f32[2]) = [scale, zero_point]
    s = params_ref[0]
    z = params_ref[1]
    inv_s = 1.0 / s                      # scalar reciprocal, off the per-element path
    q = jnp.clip(jnp.round(x_ref[...] * inv_s) + z, 0.0, QMAX) - z
    # (q - zp) is an integer in [-255, 255]: exactly representable in bf16.
    q_ref[...] = q.astype(jnp.bfloat16)


def _pick_row_tile(total_rows, cols, elem_budget=1 << 21):
    """Largest divisor of total_rows (multiple of 8) whose tile fits the element budget."""
    cap = max(8, elem_budget // max(cols, 1))
    if total_rows <= cap:
        return total_rows
    best, d = 8, 8
    while d <= cap:
        if total_rows % d == 0:
            best = d
        d += 8
    return best


def _fake_quant_centered_bf16(x, params2):
    """x: (B, R, C) f32 (R,C already padded; C multiple of 128) -> (B, R, C) bf16 of (q - zp)."""
    B, R, C = x.shape
    rows = B * R
    x2d = x.reshape(rows, C)            # row-major: free reshape
    tr = _pick_row_tile(rows, C)        # big, lane-dense tiles -> ~HBM roofline
    out = pl.pallas_call(
        _quant_kernel,
        out_shape=jax.ShapeDtypeStruct((rows, C), jnp.bfloat16),
        grid_spec=pltpu.PrefetchScalarGridSpec(
            num_scalar_prefetch=0,
            grid=(rows // tr,),
            in_specs=[
                pl.BlockSpec(memory_space=pltpu.SMEM),          # [scale, zp]
                pl.BlockSpec((tr, C), lambda i: (i, 0)),
            ],
            out_specs=pl.BlockSpec((tr, C), lambda i: (i, 0)),
        ),
        compiler_params=pltpu.CompilerParams(
            dimension_semantics=("parallel",),
            vmem_limit_bytes=40 * 1024 * 1024,
        ),
    )(params2, x2d)
    return out.reshape(B, R, C)


# ------------------------------- tiled matmul --------------------------------

def _make_qmm_kernel(fuse1, fuse2):
    """Build the matmul kernel; fuseN=True means operand N arrives as raw f32 and is
    fake-quantized in-kernel (used when its HBM reuse factor is <= 2)."""

    def kernel(params_ref, a_ref, b_ref, o_ref):
        # params_ref (SMEM, f32[4]) = [scale1, zp1, scale2, zp2]
        k = pl.program_id(3)

        a = a_ref[...]
        if fuse1:
            s1 = params_ref[0]
            z1 = params_ref[1]
            a = (jnp.clip(jnp.round(a * (1.0 / s1)) + z1, 0.0, QMAX) - z1
                 ).astype(jnp.bfloat16)
        b = b_ref[...]
        if fuse2:
            s2 = params_ref[2]
            z2 = params_ref[3]
            b = (jnp.clip(jnp.round(b * (1.0 / s2)) + z2, 0.0, QMAX) - z2
                 ).astype(jnp.bfloat16)

        # Output block is K-resident (out BlockSpec ignores k): accumulate in place,
        # no separate VMEM accumulator scratch needed.
        @pl.when(k == 0)
        def _():
            o_ref[...] = jnp.zeros_like(o_ref)

        # bf16 x bf16 -> f32 accumulation on the MXU (exact: integer operands).
        o_ref[...] += jnp.dot(a, b, preferred_element_type=jnp.float32)

        @pl.when(k == pl.num_programs(3) - 1)
        def _():
            o_ref[...] *= params_ref[0] * params_ref[2]   # fold dequant scales once

    return kernel


def qmatmul(x1, x2, params, *, tm=None, tn=None, tk=None):
    """x1: (B, M, K) f32, x2: (B, K, N) f32, params: (4,) f32 -> (B, M, N) f32."""
    B, M, K = x1.shape
    B2, K2, N = x2.shape
    assert B == B2 and K == K2

    dm, dn, dk = _default_tiles()
    tm = dm if tm is None else tm
    tn = dn if tn is None else tn
    tk = dk if tk is None else tk

    # Clamp to (rounded-up) problem dims: sublane (tm) multiple of 16 (bf16 packing),
    # lane dims (tn, tk) multiples of 128.
    tm = min(tm, _round_up(M, 16))
    tn = min(tn, _round_up(N, 128))
    tk = min(tk, _round_up(K, 128))

    M_pad = _round_up(M, tm)
    N_pad = _round_up(N, tn)
    K_pad = _round_up(K, tk)

    # v7x has 2 TensorCores: make sure there are >= 2 parallel grid tiles.
    if B * (M_pad // tm) * (N_pad // tn) == 1:
        if tn >= 256:
            tn //= 2
        elif tm >= 32:
            tm //= 2

    # Zero padding is safe: x == 0 fake-quantizes to exactly 0.
    if (M_pad, K_pad) != (M, K):
        x1 = jnp.pad(x1, ((0, 0), (0, M_pad - M), (0, K_pad - K)))
    if (K_pad, N_pad) != (K, N):
        x2 = jnp.pad(x2, ((0, 0), (0, K_pad - K), (0, N_pad - N)))

    # Each x1 tile is re-read N_pad//tn times (across j); each x2 tile M_pad//tm times.
    # With reuse <= 2, fusing the fake-quant into the matmul kernel beats a separate
    # pre-pass HBM round trip (4B reads vs 4B+2B pre-pass + 2B*reuse re-reads).
    fuse1 = (N_pad // tn) <= 2
    fuse2 = (M_pad // tm) <= 2

    a = x1 if fuse1 else _fake_quant_centered_bf16(x1, params[:2])   # (B, M_pad, K_pad)
    b = x2 if fuse2 else _fake_quant_centered_bf16(x2, params[2:])   # (B, K_pad, N_pad)

    # VMEM limit from actual buffer sum (double-buffered inputs/outputs), capped so it
    # is safe even on v7x's 64 MiB VMEM.
    bytes_a = 4 if fuse1 else 2
    bytes_b = 4 if fuse2 else 2
    vmem_need = 2 * tm * tk * bytes_a + 2 * tk * tn * bytes_b + 2 * tm * tn * 4
    vmem_limit = int(min(max(2 * vmem_need, 32 * 1024 * 1024), 56 * 1024 * 1024))

    kernel = _make_qmm_kernel(fuse1, fuse2)

    # NOTE: if DMA remains exposed after tile enlargement, add
    # pipeline_mode=pl.Buffered(3) on the a/b BlockSpecs rather than shrinking tiles.
    out = pl.pallas_call(
        kernel,
        out_shape=jax.ShapeDtypeStruct((B, M_pad, N_pad), jnp.float32),
        grid_spec=pltpu.PrefetchScalarGridSpec(
            num_scalar_prefetch=0,
            grid=(B, M_pad // tm, N_pad // tn, K_pad // tk),
            in_specs=[
                pl.BlockSpec(memory_space=pltpu.SMEM),                         # params
                pl.BlockSpec((None, tm, tk), lambda bb, i, j, k: (bb, i, k)),  # x1/q1 tile
                pl.BlockSpec((None, tk, tn), lambda bb, i, j, k: (bb, k, j)),  # x2/q2 tile
            ],
            out_specs=pl.BlockSpec((None, tm, tn), lambda bb, i, j, k: (bb, i, j)),
        ),
        compiler_params=pltpu.CompilerParams(
            dimension_semantics=("parallel", "parallel", "parallel", "arbitrary"),
            vmem_limit_bytes=vmem_limit,
        ),
    )(params, a, b)

    if (M_pad, N_pad) != (M, N):
        out = out[:, :M, :N]
    return out


# --------------------------- init-time calibration ----------------------------

def _calibrate_uint8(x):
    """Deterministic asymmetric uint8 calibration (min/max over the tensor)."""
    xmin = jnp.minimum(jnp.min(x), 0.0)
    xmax = jnp.maximum(jnp.max(x), 0.0)
    scale = jnp.maximum((xmax - xmin) / QMAX, 1e-8)
    zp = jnp.round(-xmin / scale)
    return scale.astype(jnp.float32), zp.astype(jnp.float32)


def _reference(x1, x2, params):
    s1, z1, s2, z2 = params

    def fq(x, s, z):
        return (jnp.clip(jnp.round(x * (1.0 / s)) + z, 0.0, QMAX) - z) * s

    x1q = fq(x1, s1, z1)
    x2q = fq(x2, s2, z2)
    return jnp.matmul(x1q, x2q, precision=jax.lax.Precision.HIGHEST)


if __name__ == "__main__":
    key = jax.random.PRNGKey(0)
    k1, k2, k3, k4 = jax.random.split(key, 4)

    # --- Test 1: default (per-generation) tiles; small shape -> fused in-kernel quant.
    B, M, K, N = 2, 128, 256, 128
    x1 = jax.random.normal(k1, (B, M, K), dtype=jnp.float32)
    x2 = jax.random.normal(k2, (B, K, N), dtype=jnp.float32)
    s1, z1 = _calibrate_uint8(x1)
    s2, z2 = _calibrate_uint8(x2)
    params = jnp.stack([s1, z1, s2, z2]).astype(jnp.float32)

    out = jax.block_until_ready(qmatmul(x1, x2, params))
    ref = _reference(x1, x2, params)
    assert out.shape == (B, M, N)
    assert jnp.allclose(out, ref, atol=1e-3, rtol=1e-3), "mismatch vs reference (fused path)"

    # --- Test 2: small explicit tiles force reuse > 2 -> exercises the bf16 pre-pass path.
    B2_, M2_, K2_, N2_ = 2, 256, 256, 512
    y1 = jax.random.normal(k3, (B2_, M2_, K2_), dtype=jnp.float32)
    y2 = jax.random.normal(k4, (B2_, K2_, N2_), dtype=jnp.float32)
    t1, u1 = _calibrate_uint8(y1)
    t2, u2 = _calibrate_uint8(y2)
    params2 = jnp.stack([t1, u1, t2, u2]).astype(jnp.float32)

    out2 = jax.block_until_ready(qmatmul(y1, y2, params2, tm=64, tn=128, tk=128))
    ref2 = _reference(y1, y2, params2)
    assert out2.shape == (B2_, M2_, N2_)
    assert jnp.allclose(out2, ref2, atol=1e-3, rtol=1e-3), "mismatch vs reference (pre-pass path)"

    print("KERNEL_OK")
</pallas_src>

<mosaic_0001>
module attributes {stable_mosaic.version = 11 : i64} {
  func.func @kernel(%arg0: i32, %arg1: i32, %arg2: i32, %arg3: i32, %arg4: memref<4xf32, #tpu.memory_space<smem>>, %arg5: memref<1x128x256xf32, #tpu.memory_space<vmem>>, %arg6: memref<1x256x128xf32, #tpu.memory_space<vmem>>, %arg7: memref<1x128x128xf32, #tpu.memory_space<vmem>>) attributes {dimension_semantics = [#tpu.dimension_semantics<parallel>, #tpu.dimension_semantics<parallel>, #tpu.dimension_semantics<parallel>, #tpu.dimension_semantics<arbitrary>], iteration_bounds = array<i64: 2, 1, 1, 1>, scalar_prefetch = 0 : i64, scratch_operands = 0 : i64, tpu.core_type = #tpu.core_type<tc>, window_params = [{transform_indices = @transform_0, window_bounds = array<i64: 4>}, {transform_indices = @transform_1, window_bounds = array<i64: 1, 128, 256>}, {transform_indices = @transform_2, window_bounds = array<i64: 1, 256, 128>}, {transform_indices = @transform_3, window_bounds = array<i64: 1, 128, 128>}]} {
    %c0 = arith.constant 0 : index
    %c0_0 = arith.constant 0 : index
    %c0_1 = arith.constant 0 : index
    %0 = vector.load %arg5[%c0, %c0_0, %c0_1] : memref<1x128x256xf32, #tpu.memory_space<vmem>>, vector<1x128x256xf32>
    %1 = vector.shape_cast %0 : vector<1x128x256xf32> to vector<128x256xf32>
    %c0_2 = arith.constant 0 : index
    %2 = memref.load %arg4[%c0_2] : memref<4xf32, #tpu.memory_space<smem>>
    %c1 = arith.constant 1 : index
    %3 = memref.load %arg4[%c1] : memref<4xf32, #tpu.memory_space<smem>>
    %cst = arith.constant 1.000000e+00 : f32
    %4 = arith.divf %cst, %2 : f32
    %5 = vector.broadcast %4 : f32 to vector<128x256xf32>
    %6 = arith.mulf %1, %5 : vector<128x256xf32>
    %7 = math.roundeven %6 : vector<128x256xf32>
    %8 = vector.broadcast %3 : f32 to vector<128x256xf32>
    %9 = arith.addf %7, %8 : vector<128x256xf32>
    %cst_3 = arith.constant 0.000000e+00 : f32
    %cst_4 = arith.constant 2.550000e+02 : f32
    %10 = vector.broadcast %cst_3 : f32 to vector<128x256xf32>
    %11 = arith.maximumf %10, %9 : vector<128x256xf32>
    %12 = vector.broadcast %cst_4 : f32 to vector<128x256xf32>
    %13 = arith.minimumf %12, %11 : vector<128x256xf32>
    %14 = vector.broadcast %3 : f32 to vector<128x256xf32>
    %15 = arith.subf %13, %14 : vector<128x256xf32>
    %16 = arith.truncf %15 : vector<128x256xf32> to vector<128x256xbf16>
    %c0_5 = arith.constant 0 : index
    %c0_6 = arith.constant 0 : index
    %c0_7 = arith.constant 0 : index
    %17 = vector.load %arg6[%c0_5, %c0_6, %c0_7] : memref<1x256x128xf32, #tpu.memory_space<vmem>>, vector<1x256x128xf32>
    %18 = vector.shape_cast %17 : vector<1x256x128xf32> to vector<256x128xf32>
    %c2 = arith.constant 2 : index
    %19 = memref.load %arg4[%c2] : memref<4xf32, #tpu.memory_space<smem>>
    %c3 = arith.constant 3 : index
    %20 = memref.load %arg4[%c3] : memref<4xf32, #tpu.memory_space<smem>>
    %cst_8 = arith.constant 1.000000e+00 : f32
    %21 = arith.divf %cst_8, %19 : f32
    %22 = vector.broadcast %21 : f32 to vector<256x128xf32>
    %23 = arith.mulf %18, %22 : vector<256x128xf32>
    %24 = math.roundeven %23 : vector<256x128xf32>
    %25 = vector.broadcast %20 : f32 to vector<256x128xf32>
    %26 = arith.addf %24, %25 : vector<256x128xf32>
    %cst_9 = arith.constant 0.000000e+00 : f32
    %cst_10 = arith.constant 2.550000e+02 : f32
    %27 = vector.broadcast %cst_9 : f32 to vector<256x128xf32>
    %28 = arith.maximumf %27, %26 : vector<256x128xf32>
    %29 = vector.broadcast %cst_10 : f32 to vector<256x128xf32>
    %30 = arith.minimumf %29, %28 : vector<256x128xf32>
    %31 = vector.broadcast %20 : f32 to vector<256x128xf32>
    %32 = arith.subf %30, %31 : vector<256x128xf32>
    %33 = arith.truncf %32 : vector<256x128xf32> to vector<256x128xbf16>
    %c0_i32 = arith.constant 0 : i32
    %34 = arith.cmpi eq, %arg3, %c0_i32 : i32
    %35 = arith.extui %34 : i1 to i32
    %c0_i32_11 = arith.constant 0 : i32
    %36 = arith.cmpi ne, %35, %c0_i32_11 : i32
    scf.if %36 {
      %cst_21 = arith.constant 0.000000e+00 : f32
      %47 = vector.broadcast %cst_21 : f32 to vector<128x128xf32>
      %c0_22 = arith.constant 0 : index
      %c0_23 = arith.constant 0 : index
      %c0_24 = arith.constant 0 : index
      %48 = vector.load %arg7[%c0_22, %c0_23, %c0_24] : memref<1x128x128xf32, #tpu.memory_space<vmem>>, vector<1x128x128xf32>
      %49 = vector.shape_cast %48 : vector<1x128x128xf32> to vector<128x128xf32>
      %50 = vector.shape_cast %47 : vector<128x128xf32> to vector<1x128x128xf32>
      tpu.vector_store %arg7[%c0_22, %c0_23, %c0_24], %50 {strides = array<i32>} : memref<1x128x128xf32, #tpu.memory_space<vmem>>, vector<1x128x128xf32>,
    } else {
    }
    %c0_12 = arith.constant 0 : index
    %c0_13 = arith.constant 0 : index
    %c0_14 = arith.constant 0 : index
    %37 = vector.load %arg7[%c0_12, %c0_13, %c0_14] : memref<1x128x128xf32, #tpu.memory_space<vmem>>, vector<1x128x128xf32>
    %38 = vector.shape_cast %37 : vector<1x128x128xf32> to vector<128x128xf32>
    %cst_15 = arith.constant dense<0.000000e+00> : vector<128x128xf32>
    %39 = tpu.matmul %16, %33, %cst_15 {dimension_numbers = #tpu.dot_dimension_numbers<[1], [0], [0], [1], [0, 0, 1, 1], [], []>} : vector<128x256xbf16>, vector<256x128xbf16>, vector<128x128xf32> -> vector<128x128xf32>
    %40 = arith.addf %38, %39 : vector<128x128xf32>
    %c0_16 = arith.constant 0 : index
    %c0_17 = arith.constant 0 : index
    %c0_18 = arith.constant 0 : index
    %41 = vector.load %arg7[%c0_16, %c0_17, %c0_18] : memref<1x128x128xf32, #tpu.memory_space<vmem>>, vector<1x128x128xf32>
    %42 = vector.shape_cast %41 : vector<1x128x128xf32> to vector<128x128xf32>
    %43 = vector.shape_cast %40 : vector<128x128xf32> to vector<1x128x128xf32>
    tpu.vector_store %arg7[%c0_16, %c0_17, %c0_18], %43 {strides = array<i32>} : memref<1x128x128xf32, #tpu.memory_space<vmem>>, vector<1x128x128xf32>,
    %c0_i32_19 = arith.constant 0 : i32
    %44 = arith.cmpi eq, %arg3, %c0_i32_19 : i32
    %45 = arith.extui %44 : i1 to i32
    %c0_i32_20 = arith.constant 0 : i32
    %46 = arith.cmpi ne, %45, %c0_i32_20 : i32
    scf.if %46 {
      %c0_21 = arith.constant 0 : index
      %c0_22 = arith.constant 0 : index
      %c0_23 = arith.constant 0 : index
      %47 = vector.load %arg7[%c0_21, %c0_22, %c0_23] : memref<1x128x128xf32, #tpu.memory_space<vmem>>, vector<1x128x128xf32>
      %48 = vector.shape_cast %47 : vector<1x128x128xf32> to vector<128x128xf32>
      %c0_24 = arith.constant 0 : index
      %49 = memref.load %arg4[%c0_24] : memref<4xf32, #tpu.memory_space<smem>>
      %c2_25 = arith.constant 2 : index
      %50 = memref.load %arg4[%c2_25] : memref<4xf32, #tpu.memory_space<smem>>
      %51 = arith.mulf %49, %50 : f32
      %52 = vector.broadcast %51 : f32 to vector<128x128xf32>
      %53 = arith.mulf %48, %52 : vector<128x128xf32>
      %c0_26 = arith.constant 0 : index
      %c0_27 = arith.constant 0 : index
      %c0_28 = arith.constant 0 : index
      %54 = vector.load %arg7[%c0_26, %c0_27, %c0_28] : memref<1x128x128xf32, #tpu.memory_space<vmem>>, vector<1x128x128xf32>
      %55 = vector.shape_cast %54 : vector<1x128x128xf32> to vector<128x128xf32>
      %56 = vector.shape_cast %53 : vector<128x128xf32> to vector<1x128x128xf32>
      tpu.vector_store %arg7[%c0_26, %c0_27, %c0_28], %56 {strides = array<i32>} : memref<1x128x128xf32, #tpu.memory_space<vmem>>, vector<1x128x128xf32>,
    } else {
    }
    return
  }
  func.func @transform_0(%arg0: i32, %arg1: i32, %arg2: i32, %arg3: i32) -> i32 {
    %c0_i32 = arith.constant 0 : i32
    %c0_i32_0 = arith.constant 0 : i32
    return %c0_i32 : i32
  }
  func.func @transform_1(%arg0: i32, %arg1: i32, %arg2: i32, %arg3: i32) -> (i32, i32, i32) {
    %c0_i32 = arith.constant 0 : i32
    return %arg0, %arg1, %arg3 : i32, i32, i32
  }
  func.func @transform_2(%arg0: i32, %arg1: i32, %arg2: i32, %arg3: i32) -> (i32, i32, i32) {
    %c0_i32 = arith.constant 0 : i32
    return %arg0, %arg3, %arg2 : i32, i32, i32
  }
  func.func @transform_3(%arg0: i32, %arg1: i32, %arg2: i32, %arg3: i32) -> (i32, i32, i32) {
    %c0_i32 = arith.constant 0 : i32
    return %arg0, %arg1, %arg2 : i32, i32, i32
  }
}

</mosaic_0001>

<llo_original>
// kernel: tpu_custom_call.1
$region0: #{tpu_custom_call.1}
  #allocation0 [shape = 'u32[]', space=smem, size = 0x4, offset = 0x4, fixed_abs, tag = 'smem constant byte address 0x4 - core index']
  #allocation1 [shape = 'u32[72,128]{1,0:T(1,128)}', space=vmem, size = 0x9000, scoped, tag = 'internal scratch']
  %s0 = inlined_call_operand.hbm [shape: f32[4], index: 0, kind: input, shape index: {}]
  %s1 = inlined_call_operand.hbm [shape: f32[2,128,256], index: 1, kind: input, shape index: {}]
  %s2 = inlined_call_operand.hbm [shape: f32[2,256,128], index: 2, kind: input, shape index: {}]
  %s3 = inlined_call_operand.hbm [shape: f32[2,128,128], index: 3, kind: output, shape index: {}]
  %s4 = sld [smem:[#allocation0]]
  $region65: #{tpu_custom_call.1} parent=0
    _
  %s6 = ssub.s32 1, %s4
  %s7 = scalar_select 0, %s6, %s4
  $region1: #{tpu_custom_call.1} parent=0
    #allocation2 [shape = 'u8[512]{0}', space=smem, size = 0x200, scoped, tag = 'input window, operand 0, single buffered']
    #allocation3 [shape = 's32[2]{0}', space=sflag, size = 0x8, scoped, tag = 'scoped memory for tpu_custom_call.1']
    #allocation4 [shape = 's32[2]{0}', space=sflag, size = 0x8, scoped, tag = 'scoped memory for tpu_custom_call.1']
    #allocation5 [shape = 's32[2]{0}', space=sflag, size = 0x8, scoped, tag = 'scoped memory for tpu_custom_call.1']
    #allocation6 [shape = 'u8[262144]{0}', space=vmem, size = 0x40000, scoped, tag = 'input window, operand 1']
    #allocation7 [shape = 'u8[262144]{0}', space=vmem, size = 0x40000, scoped, tag = 'input window, operand 2']
    #allocation8 [shape = 's32[2]{0}', space=sflag, size = 0x8, scoped, tag = 'scoped memory for tpu_custom_call.1']
    #allocation9 [shape = 'u8[131072]{0}', space=vmem, size = 0x20000, scoped, tag = 'output window, operand 0']
    %8 = vsyncpa [#allocation5], 0
    %9 = vsyncpa [#allocation3], 0
    %s10 = scalar_lea.sflag [#allocation3], 1
    %11 = vsyncpa %s10, 0
    %12 = vsyncpa [#allocation8], 0
    %s13 = scalar_lea.sflag [#allocation8], 1
    %14 = vsyncpa %s13, 0
    %15 = vsyncpa [#allocation4], 0
    %s16 = scalar_lea.sflag [#allocation4], 1
    %17 = vsyncpa %s16, 0
    loop: start=0, step=1, limit=4
    $region2: #{tpu_custom_call.1} parent=1 // loop_pre_header
      _
    $region3: #{tpu_custom_call.1} parent=1 // loop_header
      %s19 = sphi 0, %s23
      %p20 = scmp.ge.s32.totalorder %s19, 4
      %s26 = sphi 0, %s52
      %s27 = sphi 0, %s48
      %s28 = sphi 0, %s44
      %s29 = sphi 0, %s40
      %s30 = sphi 0, %s26
      %s31 = sphi 0, %s27
      %s32 = sphi 0, %s28
      %s33 = sphi 0, %s29
      %s34 = sphi 0, %s30
      %s35 = sphi 0, %s31
      %s36 = sphi 0, %s32
      %s37 = sphi 0, %s33
      %s53 = sphi 0, %s53
      %s55 = sphi 0, %s53
      %s56 = sphi 0, %s55
      %s70 = sphi 0, %s56
      %s80 = sphi 0, %s82
      %s83 = sphi 0, %s80
      %s84 = sphi 0, %s83
      %s100 = sphi 0, %s84
      %s110 = sphi 0, %s112
      %s113 = sphi 0, %s110
      %s114 = sphi 0, %s113
      %s130 = sphi 0, %s114
      %s140 = sphi 0, %s142
      %s143 = sphi 0, %s140
      %s144 = sphi 0, %s143
      %s160 = sphi 0, %s144
    $region4: #{tpu_custom_call.1} parent=1 // loop_header_branch
      %22 = sbr.rel (%p20) target = $region8
    $region5: #{tpu_custom_call.1} parent=1 // loop_body
      %s24 = ssub.s32 %s19, 1
      %s25 = ssub.s32 %s19, 2
      %s38 = sadd.s32 1, %s29
      %p39 = scmp.ge.s32.totalorder %s38, 1
      %s40 = scalar_select %p39, 0, %s38
      %s41 = sadd.s32 1, %s28
      %s42 = scalar_select %p39, %s41, %s28
      %p43 = scmp.ge.s32.totalorder %s42, 1
      %s44 = scalar_select %p43, 0, %s42
      %s45 = sadd.s32 1, %s27
      %s46 = scalar_select %p43, %s45, %s27
      %p47 = scmp.ge.s32.totalorder %s46, 1
      %s48 = scalar_select %p47, 0, %s46
      %s49 = sadd.s32 1, %s26
      %s50 = scalar_select %p47, %s49, %s26
      %p51 = scmp.ge.s32.totalorder %s50, 2
      %s52 = scalar_select %p51, 0, %s50
      %s54 = sadd.s32 %s53, 1
      %p57 = scmp.eq.s32.totalorder %s19, 1
      %p58 = scmp.ne.s32.totalorder %s53, %s55
      %p59 = scmp.eq.s32.totalorder %s19, 0
      %p60 = por %p58, %p59
      %p61 = scmp.ne.s32.totalorder %s53, %s55
      %p62 = scmp.eq.s32.totalorder %s24, 1
      %p63 = por %p61, %p62
      %p64 = scmp.ne.s32.totalorder %s55, %s56
      %p65 = scmp.eq.s32.totalorder %s24, 0
      %p66 = por %p64, %p65
      %p67 = scmp.ne.s32.totalorder %s55, %s56
      %p68 = scmp.eq.s32.totalorder %s25, 1
      %p69 = por %p67, %p68
      %p71 = scmp.ne.s32.totalorder %s56, %s70
      %p72 = scmp.eq.s32.totalorder %s25, 0
      %p73 = por %p71, %p72
      %s74 = ssub.s32 %s26, %s52
      %s75 = ssub.s32 %s27, %s48
      %s76 = sor.u32 %s74, %s75
      %s77 = ssub.s32 %s29, %s40
      %s78 = sor.u32 %s76, %s77
      %p79 = scmp.eq.s32.totalorder %s78, 0
      %s81 = sadd.s32 %s80, 1
      %s82 = scalar_select %p79, %s80, %s81
      %p85 = pneg %p79
      %p86 = scmp.eq.s32.totalorder %s19, 1
      %p87 = por %p85, %p86
      %p88 = scmp.ne.s32.totalorder %s80, %s83
      %p89 = scmp.eq.s32.totalorder %s19, 0
      %p90 = por %p88, %p89
      %p91 = scmp.ne.s32.totalorder %s80, %s83
      %p92 = scmp.eq.s32.totalorder %s24, 1
      %p93 = por %p91, %p92
      %p94 = scmp.ne.s32.totalorder %s83, %s84
      %p95 = scmp.eq.s32.totalorder %s24, 0
      %p96 = por %p94, %p95
      %p97 = scmp.ne.s32.totalorder %s83, %s84
      %p98 = scmp.eq.s32.totalorder %s25, 1
      %p99 = por %p97, %p98
      %p101 = scmp.ne.s32.totalorder %s84, %s100
      %p102 = scmp.eq.s32.totalorder %s25, 0
      %p103 = por %p101, %p102
      %s104 = ssub.s32 %s26, %s52
      %s105 = ssub.s32 %s29, %s40
      %s106 = sor.u32 %s104, %s105
      %s107 = ssub.s32 %s28, %s44
      %s108 = sor.u32 %s106, %s107
      %p109 = scmp.eq.s32.totalorder %s108, 0
      %s111 = sadd.s32 %s110, 1
      %s112 = scalar_select %p109, %s110, %s111
      %p115 = pneg %p109
      %p116 = scmp.eq.s32.totalorder %s19, 1
      %p117 = por %p115, %p116
      %p118 = scmp.ne.s32.totalorder %s110, %s113
      %p119 = scmp.eq.s32.totalorder %s19, 0
      %p120 = por %p118, %p119
      %p121 = scmp.ne.s32.totalorder %s110, %s113
      %p122 = scmp.eq.s32.totalorder %s24, 1
      %p123 = por %p121, %p122
      %p124 = scmp.ne.s32.totalorder %s113, %s114
      %p125 = scmp.eq.s32.totalorder %s24, 0
      %p126 = por %p124, %p125
      %p127 = scmp.ne.s32.totalorder %s113, %s114
      %p128 = scmp.eq.s32.totalorder %s25, 1
      %p129 = por %p127, %p128
      %p131 = scmp.ne.s32.totalorder %s114, %s130
      %p132 = scmp.eq.s32.totalorder %s25, 0
      %p133 = por %p131, %p132
      %s134 = ssub.s32 %s26, %s52
      %s135 = ssub.s32 %s27, %s48
      %s136 = sor.u32 %s134, %s135
      %s137 = ssub.s32 %s28, %s44
      %s138 = sor.u32 %s136, %s137
      %p139 = scmp.eq.s32.totalorder %s138, 0
      %s141 = sadd.s32 %s140, 1
      %s142 = scalar_select %p139, %s140, %s141
      %p145 = pneg %p139
      %p146 = scmp.eq.s32.totalorder %s19, 1
      %p147 = por %p145, %p146
      %p148 = scmp.ne.s32.totalorder %s140, %s143
      %p149 = scmp.eq.s32.totalorder %s19, 0
      %p150 = por %p148, %p149
      %p151 = scmp.ne.s32.totalorder %s140, %s143
      %p152 = scmp.eq.s32.totalorder %s24, 1
      %p153 = por %p151, %p152
      %p154 = scmp.ne.s32.totalorder %s143, %s144
      %p155 = scmp.eq.s32.totalorder %s24, 0
      %p156 = por %p154, %p155
      %p157 = scmp.ne.s32.totalorder %s143, %s144
      %p158 = scmp.eq.s32.totalorder %s25, 1
      %p159 = por %p157, %p158
      %p161 = scmp.ne.s32.totalorder %s144, %s160
      %p162 = scmp.eq.s32.totalorder %s25, 0
      %p163 = por %p161, %p162
      %p164 = scmp.le.s32.totalorder 1, %s19
      %p165 = scmp.lt.s32.totalorder %s19, 3
      %p166 = pnand %p164, %p165
      %p167 = pneg %p166
      // Predicated region
      $region9: #{tpu_custom_call.1} parent=5 // pred_check
        _
      $region10: #{tpu_custom_call.1} parent=5 // pred_check_branch
        %169 = sbr.rel (%p166) target = $region12
      $region11: #{tpu_custom_call.1} parent=5 // pred_region
        %s170 = ssub.s32 %s19, 1
        // Predicated region
        $region13: #{tpu_custom_call.1} parent=11 // pred_check
          %p171 = pneg %p66
        $region14: #{tpu_custom_call.1} parent=11 // pred_check_branch
          %173 = sbr.rel (%p171) target = $region16
        $region15: #{tpu_custom_call.1} parent=11 // pred_region
          %175 = vsyncadd [#allocation5], 0
          %s177 = sshll.u32 %s0, 4
          %s178 = int_to_ptr.hbm [resolvable:$true] %s177
          %180 = dma.hbm_to_smem %s178, 16, [#allocation2], [#allocation5]
        $region16: #{tpu_custom_call.1} parent=11 // pred_fallthru
          _
      $region12: #{tpu_custom_call.1} parent=5 // pred_fallthru
        _
      %p181 = scmp.lt.s32.totalorder %s19, 2
      // Predicated region
      $region17: #{tpu_custom_call.1} parent=5 // pred_check
        %p182 = pneg %p181
      $region18: #{tpu_custom_call.1} parent=5 // pred_check_branch
        %184 = sbr.rel (%p182) target = $region20
      $region19: #{tpu_custom_call.1} parent=5 // pred_region
        // Predicated region
        $region21: #{tpu_custom_call.1} parent=19 // pred_check
          %p185 = pneg %p90
        $region22: #{tpu_custom_call.1} parent=19 // pred_check_branch
          %187 = sbr.rel (%p185) target = $region24
        $region23: #{tpu_custom_call.1} parent=19 // pred_region
          %s188 = sand.u32 %s80, 1
          %s189 = scalar_lea.sflag [#allocation3], %s188
          %s190 = sand.u32 %s80, 1
          %s191 = smul.addr %s190, 256
          %s192 = scalar_lea.vmem [#allocation6], %s191
          %s193 = smul.u32 16, %s27
          %s194 = smul.u32 2, %s29
          %196 = vsyncadd %s189, 0
          %s197 = smul.addr %s193, 2
          %s198 = sadd.s32 %s194, %s197
          %s199 = smul.addr %s26, 32
          %s200 = sadd.s32 %s198, %s199
          %s201 = smul.addr %s200, 8
          %s202 = scalar_lea.hbm %s1, %s201
          %s203 = sshll.u32 %s202, 4
          %s204 = int_to_ptr.hbm [resolvable:$true] %s203
          %s205 = sshll.u32 %s192, 4
          %s206 = int_to_ptr.vmem [resolvable:$true] %s205
          %211 = dma.hbm_to_vmem [thread:$0]  %s204, 4096, %s206, %s189, 256, 256, 16
        $region24: #{tpu_custom_call.1} parent=19 // pred_fallthru
          _
        // Predicated region
        $region25: #{tpu_custom_call.1} parent=19 // pred_check
          %p212 = pneg %p120
        $region26: #{tpu_custom_call.1} parent=19 // pred_check_branch
          %214 = sbr.rel (%p212) target = $region28
        $region27: #{tpu_custom_call.1} parent=19 // pred_region
          %s215 = sand.u32 %s110, 1
          %s216 = scalar_lea.sflag [#allocation8], %s215
          %s217 = sand.u32 %s110, 1
          %s218 = smul.addr %s217, 256
          %s219 = scalar_lea.vmem [#allocation7], %s218
          %s220 = smul.u32 32, %s29
          %222 = vsyncadd %s216, 0
          %s223 = sadd.s32 %s28, %s220
          %s224 = smul.addr %s26, 32
          %s225 = sadd.s32 %s223, %s224
          %s226 = smul.addr %s225, 8
          %s227 = scalar_lea.hbm %s2, %s226
          %s228 = sshll.u32 %s227, 4
          %s229 = int_to_ptr.hbm [resolvable:$true] %s228
          %s230 = sshll.u32 %s219, 4
          %s231 = int_to_ptr.vmem [resolvable:$true] %s230
          %236 = dma.hbm_to_vmem [thread:$0]  %s229, 4096, %s231, %s216, 128, 128, 8
        $region28: #{tpu_custom_call.1} parent=19 // pred_fallthru
          _
      $region20: #{tpu_custom_call.1} parent=5 // pred_fallthru
        _
      %p237 = scmp.le.s32.totalorder 1, %s19
      %p238 = scmp.lt.s32.totalorder %s19, 3
      %p239 = pnand %p237, %p238
      %p240 = pneg %p239
      // Predicated region
      $region29: #{tpu_custom_call.1} parent=5 // pred_check
        _
      $region30: #{tpu_custom_call.1} parent=5 // pred_check_branch
        %242 = sbr.rel (%p239) target = $region32
      $region31: #{tpu_custom_call.1} parent=5 // pred_region
        %s243 = ssub.s32 %s19, 1
        // Predicated region
        $region33: #{tpu_custom_call.1} parent=31 // pred_check
          %p244 = pneg %p66
        $region34: #{tpu_custom_call.1} parent=31 // pred_check_branch
          %246 = sbr.rel (%p244) target = $region36
        $region35: #{tpu_custom_call.1} parent=31 // pred_region
          %248 = dma.done [#allocation5], 16
        $region36: #{tpu_custom_call.1} parent=31 // pred_fallthru
          _
        %s249 = sand.u32 %s83, 1
        %s250 = scalar_lea.sflag [#allocation3], %s249
        %s251 = sand.u32 %s83, 1
        %s252 = smul.addr %s251, 256
        %s253 = scalar_lea.vmem [#allocation6], %s252
        // Predicated region
        $region37: #{tpu_custom_call.1} parent=31 // pred_check
          %p254 = pneg %p96
        $region38: #{tpu_custom_call.1} parent=31 // pred_check_branch
          %256 = sbr.rel (%p254) target = $region40
        $region39: #{tpu_custom_call.1} parent=31 // pred_region
          %258 = dma.done %s250, 4096
        $region40: #{tpu_custom_call.1} parent=31 // pred_fallthru
          _
        %s259 = sand.u32 %s113, 1
        %s260 = scalar_lea.sflag [#allocation8], %s259
        %s261 = sand.u32 %s113, 1
        %s262 = smul.addr %s261, 256
        %s263 = scalar_lea.vmem [#allocation7], %s262
        // Predicated region
        $region41: #{tpu_custom_call.1} parent=31 // pred_check
          %p264 = pneg %p126
        $region42: #{tpu_custom_call.1} parent=31 // pred_check_branch
          %266 = sbr.rel (%p264) target = $region44
        $region43: #{tpu_custom_call.1} parent=31 // pred_region
          %268 = dma.done %s260, 4096
        $region44: #{tpu_custom_call.1} parent=31 // pred_fallthru
          _
        %269 = sfence
        %p270 = pneg %p66
        %p271 = pneg %p63
        %s272 = sand.u32 %s83, 1
        %s273 = scalar_lea.sflag [#allocation3], %s272
        %s274 = sand.u32 %s83, 1
        %s275 = smul.addr %s274, 256
        %s276 = scalar_lea.vmem [#allocation6], %s275
        %p277 = pneg %p96
        %p278 = pneg %p93
        %s279 = sand.u32 %s113, 1
        %s280 = scalar_lea.sflag [#allocation8], %s279
        %s281 = sand.u32 %s113, 1
        %s282 = smul.addr %s281, 256
        %s283 = scalar_lea.vmem [#allocation7], %s282
        %p284 = pneg %p126
        %p285 = pneg %p123
        %p286 = pneg %p156
        %p287 = pneg %p153
        %s288 = sand.u32 %s143, 1
        %s289 = scalar_lea.sflag [#allocation4], %s288
        %s290 = sand.u32 %s143, 1
        %s291 = smul.addr %s290, 128
        %s292 = scalar_lea.vmem [#allocation9], %s291
        %s293 = smul.u32 16, %s31
        %s294 = smul.u32 2, %s33
        %s295 = smul.u32 32, %s33
        %s296 = smul.u32 16, %s31
        %v297 = vld [vmem:[%s253] sm:$0xff]
        %v298 = vld [vmem:[%s253 + $0x8] sm:$0xff]
        %v299 = vld [vmem:[%s253 + $0x10] sm:$0xff]
        %v300 = vld [vmem:[%s253 + $0x18] sm:$0xff]
        %v301 = vld [vmem:[%s253 + $0x20] sm:$0xff]
        %v302 = vld [vmem:[%s253 + $0x28] sm:$0xff]
        %v303 = vld [vmem:[%s253 + $0x30] sm:$0xff]
        %v304 = vld [vmem:[%s253 + $0x38] sm:$0xff]
        %v305 = vld [vmem:[%s253 + $0x40] sm:$0xff]
        %v306 = vld [vmem:[%s253 + $0x48] sm:$0xff]
        %v307 = vld [vmem:[%s253 + $0x50] sm:$0xff]
        %v308 = vld [vmem:[%s253 + $0x58] sm:$0xff]
        %v309 = vld [vmem:[%s253 + $0x60] sm:$0xff]
        %v310 = vld [vmem:[%s253 + $0x68] sm:$0xff]
        %v311 = vld [vmem:[%s253 + $0x70] sm:$0xff]
        %v312 = vld [vmem:[%s253 + $0x78] sm:$0xff]
        %v313 = vld [vmem:[%s253 + $0x80] sm:$0xff]
        %v314 = vld [vmem:[%s253 + $0x88] sm:$0xff]
        %v315 = vld [vmem:[%s253 + $0x90] sm:$0xff]
        %v316 = vld [vmem:[%s253 + $0x98] sm:$0xff]
        %v317 = vld [vmem:[%s253 + $0xa0] sm:$0xff]
        %v318 = vld [vmem:[%s253 + $0xa8] sm:$0xff]
        %v319 = vld [vmem:[%s253 + $0xb0] sm:$0xff]
        %v320 = vld [vmem:[%s253 + $0xb8] sm:$0xff]
        %v321 = vld [vmem:[%s253 + $0xc0] sm:$0xff]
        %v322 = vld [vmem:[%s253 + $0xc8] sm:$0xff]
        %v323 = vld [vmem:[%s253 + $0xd0] sm:$0xff]
        %v324 = vld [vmem:[%s253 + $0xd8] sm:$0xff]
        %v325 = vld [vmem:[%s253 + $0xe0] sm:$0xff]
        %v326 = vld [vmem:[%s253 + $0xe8] sm:$0xff]
        %v327 = vld [vmem:[%s253 + $0xf0] sm:$0xff]
        %v328 = vld [vmem:[%s253 + $0xf8] sm:$0xff]
        %s329 = sld [smem:[#allocation2]]
        %s330 = sld [smem:[#allocation2 + $0x1]]
        %v331 = vstv %s329
        %v332 = vrcp.pop %v331
        %v333 = vmul.f32 %v331, %v332
        %v334 = vsub.f32 1.0, %v333
        %v335 = vmul.f32 %v332, %v334
        %v336 = vadd.f32 %v332, %v335
        %vm337 = vweird.f32 %v331
        %vm338 = vweird.f32 %v332
        %vm339 = vmor %vm337, %vm338
        %v340 = vsel %vm339, %v332, %v336
        %v341 = vand.u32 2147483647, %v331
        %vm342 = vcmp.eq.f32.partialorder %v341, 8.507059e+37
        %v343 = vand.u32 %v331, 2147483648
        %v344 = vor.u32 1.1754944e-38, %v343
        %v345 = vsel %vm342, %v344, %v340
        %s346 = vtos %v345
        %v347 = vstv %s346
        %v348 = vmul.f32 %v297, %v347
        %v349 = vmul.f32 %v298, %v347
        %v350 = vmul.f32 %v299, %v347
        %v351 = vmul.f32 %v300, %v347
        %v352 = vmul.f32 %v301, %v347
        %v353 = vmul.f32 %v302, %v347
        %v354 = vmul.f32 %v303, %v347
        %v355 = vmul.f32 %v304, %v347
        %v356 = vmul.f32 %v305, %v347
        %v357 = vmul.f32 %v306, %v347
        %v358 = vmul.f32 %v307, %v347
        %v359 = vmul.f32 %v308, %v347
        %v360 = vmul.f32 %v309, %v347
        %v361 = vmul.f32 %v310, %v347
        %v362 = vmul.f32 %v311, %v347
        %v363 = vmul.f32 %v312, %v347
        %v364 = vmul.f32 %v313, %v347
        %v365 = vmul.f32 %v314, %v347
        %v366 = vmul.f32 %v315, %v347
        %v367 = vmul.f32 %v316, %v347
        %v368 = vmul.f32 %v317, %v347
        %v369 = vmul.f32 %v318, %v347
        %v370 = vmul.f32 %v319, %v347
        %v371 = vmul.f32 %v320, %v347
        %v372 = vmul.f32 %v321, %v347
        %v373 = vmul.f32 %v322, %v347
        %v374 = vmul.f32 %v323, %v347
        %v375 = vmul.f32 %v324, %v347
        %v376 = vmul.f32 %v325, %v347
        %v377 = vmul.f32 %v326, %v347
        %v378 = vmul.f32 %v327, %v347
        %v379 = vmul.f32 %v328, %v347
        %v380 = vround.ne.pseudo %v348
        %v381 = vround.ne.pseudo %v349
        %v382 = vround.ne.pseudo %v350
        %v383 = vround.ne.pseudo %v351
        %v384 = vround.ne.pseudo %v352
        %v385 = vround.ne.pseudo %v353
        %v386 = vround.ne.pseudo %v354
        %v387 = vround.ne.pseudo %v355
        %v388 = vround.ne.pseudo %v356
        %v389 = vround.ne.pseudo %v357
        %v390 = vround.ne.pseudo %v358
        %v391 = vround.ne.pseudo %v359
        %v392 = vround.ne.pseudo %v360
        %v393 = vround.ne.pseudo %v361
        %v394 = vround.ne.pseudo %v362
        %v395 = vround.ne.pseudo %v363
        %v396 = vround.ne.pseudo %v364
        %v397 = vround.ne.pseudo %v365
        %v398 = vround.ne.pseudo %v366
        %v399 = vround.ne.pseudo %v367
        %v400 = vround.ne.pseudo %v368
        %v401 = vround.ne.pseudo %v369
        %v402 = vround.ne.pseudo %v370
        %v403 = vround.ne.pseudo %v371
        %v404 = vround.ne.pseudo %v372
        %v405 = vround.ne.pseudo %v373
        %v406 = vround.ne.pseudo %v374
        %v407 = vround.ne.pseudo %v375
        %v408 = vround.ne.pseudo %v376
        %v409 = vround.ne.pseudo %v377
        %v410 = vround.ne.pseudo %v378
        %v411 = vround.ne.pseudo %v379
        %v412 = vstv %s330
        %v413 = vadd.f32 %v380, %v412
        %v414 = vadd.f32 %v381, %v412
        %v415 = vadd.f32 %v382, %v412
        %v416 = vadd.f32 %v383, %v412
        %v417 = vadd.f32 %v384, %v412
        %v418 = vadd.f32 %v385, %v412
        %v419 = vadd.f32 %v386, %v412
        %v420 = vadd.f32 %v387, %v412
        %v421 = vadd.f32 %v388, %v412
        %v422 = vadd.f32 %v389, %v412
        %v423 = vadd.f32 %v390, %v412
        %v424 = vadd.f32 %v391, %v412
        %v425 = vadd.f32 %v392, %v412
        %v426 = vadd.f32 %v393, %v412
        %v427 = vadd.f32 %v394, %v412
        %v428 = vadd.f32 %v395, %v412
        %v429 = vadd.f32 %v396, %v412
        %v430 = vadd.f32 %v397, %v412
        %v431 = vadd.f32 %v398, %v412
        %v432 = vadd.f32 %v399, %v412
        %v433 = vadd.f32 %v400, %v412
        %v434 = vadd.f32 %v401, %v412
        %v435 = vadd.f32 %v402, %v412
        %v436 = vadd.f32 %v403, %v412
        %v437 = vadd.f32 %v404, %v412
        %v438 = vadd.f32 %v405, %v412
        %v439 = vadd.f32 %v406, %v412
        %v440 = vadd.f32 %v407, %v412
        %v441 = vadd.f32 %v408, %v412
        %v442 = vadd.f32 %v409, %v412
        %v443 = vadd.f32 %v410, %v412
        %v444 = vadd.f32 %v411, %v412
        %v445 = vmax.f32 %v413, 0.0
        %v446 = vmax.f32 %v414, 0.0
        %v447 = vmax.f32 %v415, 0.0
        %v448 = vmax.f32 %v416, 0.0
        %v449 = vmax.f32 %v417, 0.0
        %v450 = vmax.f32 %v418, 0.0
        %v451 = vmax.f32 %v419, 0.0
        %v452 = vmax.f32 %v420, 0.0
        %v453 = vmax.f32 %v421, 0.0
        %v454 = vmax.f32 %v422, 0.0
        %v455 = vmax.f32 %v423, 0.0
        %v456 = vmax.f32 %v424, 0.0
        %v457 = vmax.f32 %v425, 0.0
        %v458 = vmax.f32 %v426, 0.0
        %v459 = vmax.f32 %v427, 0.0
        %v460 = vmax.f32 %v428, 0.0
        %v461 = vmax.f32 %v429, 0.0
        %v462 = vmax.f32 %v430, 0.0
        %v463 = vmax.f32 %v431, 0.0
        %v464 = vmax.f32 %v432, 0.0
        %v465 = vmax.f32 %v433, 0.0
        %v466 = vmax.f32 %v434, 0.0
        %v467 = vmax.f32 %v435, 0.0
        %v468 = vmax.f32 %v436, 0.0
        %v469 = vmax.f32 %v437, 0.0
        %v470 = vmax.f32 %v438, 0.0
        %v471 = vmax.f32 %v439, 0.0
        %v472 = vmax.f32 %v440, 0.0
        %v473 = vmax.f32 %v441, 0.0
        %v474 = vmax.f32 %v442, 0.0
        %v475 = vmax.f32 %v443, 0.0
        %v476 = vmax.f32 %v444, 0.0
        %v477 = vmin.f32 %v445, 255.0
        %v478 = vmin.f32 %v446, 255.0
        %v479 = vmin.f32 %v447, 255.0
        %v480 = vmin.f32 %v448, 255.0
        %v481 = vmin.f32 %v449, 255.0
        %v482 = vmin.f32 %v450, 255.0
        %v483 = vmin.f32 %v451, 255.0
        %v484 = vmin.f32 %v452, 255.0
        %v485 = vmin.f32 %v453, 255.0
        %v486 = vmin.f32 %v454, 255.0
        %v487 = vmin.f32 %v455, 255.0
        %v488 = vmin.f32 %v456, 255.0
        %v489 = vmin.f32 %v457, 255.0
        %v490 = vmin.f32 %v458, 255.0
        %v491 = vmin.f32 %v459, 255.0
        %v492 = vmin.f32 %v460, 255.0
        %v493 = vmin.f32 %v461, 255.0
        %v494 = vmin.f32 %v462, 255.0
        %v495 = vmin.f32 %v463, 255.0
        %v496 = vmin.f32 %v464, 255.0
        %v497 = vmin.f32 %v465, 255.0
        %v498 = vmin.f32 %v466, 255.0
        %v499 = vmin.f32 %v467, 255.0
        %v500 = vmin.f32 %v468, 255.0
        %v501 = vmin.f32 %v469, 255.0
        %v502 = vmin.f32 %v470, 255.0
        %v503 = vmin.f32 %v471, 255.0
        %v504 = vmin.f32 %v472, 255.0
        %v505 = vmin.f32 %v473, 255.0
        %v506 = vmin.f32 %v474, 255.0
        %v507 = vmin.f32 %v475, 255.0
        %v508 = vmin.f32 %v476, 255.0
        %v509 = vsub.f32 %v477, %v412
        %v510 = vsub.f32 %v478, %v412
        %v511 = vsub.f32 %v479, %v412
        %v512 = vsub.f32 %v480, %v412
        %v513 = vsub.f32 %v481, %v412
        %v514 = vsub.f32 %v482, %v412
        %v515 = vsub.f32 %v483, %v412
        %v516 = vsub.f32 %v484, %v412
        %v517 = vsub.f32 %v485, %v412
        %v518 = vsub.f32 %v486, %v412
        %v519 = vsub.f32 %v487, %v412
        %v520 = vsub.f32 %v488, %v412
        %v521 = vsub.f32 %v489, %v412
        %v522 = vsub.f32 %v490, %v412
        %v523 = vsub.f32 %v491, %v412
        %v524 = vsub.f32 %v492, %v412
        %v525 = vsub.f32 %v493, %v412
        %v526 = vsub.f32 %v494, %v412
        %v527 = vsub.f32 %v495, %v412
        %v528 = vsub.f32 %v496, %v412
        %v529 = vsub.f32 %v497, %v412
        %v530 = vsub.f32 %v498, %v412
        %v531 = vsub.f32 %v499, %v412
        %v532 = vsub.f32 %v500, %v412
        %v533 = vsub.f32 %v501, %v412
        %v534 = vsub.f32 %v502, %v412
        %v535 = vsub.f32 %v503, %v412
        %v536 = vsub.f32 %v504, %v412
        %v537 = vsub.f32 %v505, %v412
        %v538 = vsub.f32 %v506, %v412
        %v539 = vsub.f32 %v507, %v412
        %v540 = vsub.f32 %v508, %v412
        %v541 = vpack.c.bf16 %v511, %v509
        %v542 = vpack.c.bf16 %v512, %v510
        %v543 = vpack.c.bf16 %v515, %v513
        %v544 = vpack.c.bf16 %v516, %v514
        %v545 = vpack.c.bf16 %v519, %v517
        %v546 = vpack.c.bf16 %v520, %v518
        %v547 = vpack.c.bf16 %v523, %v521
        %v548 = vpack.c.bf16 %v524, %v522
        %v549 = vpack.c.bf16 %v527, %v525
        %v550 = vpack.c.bf16 %v528, %v526
        %v551 = vpack.c.bf16 %v531, %v529
        %v552 = vpack.c.bf16 %v532, %v530
        %v553 = vpack.c.bf16 %v535, %v533
        %v554 = vpack.c.bf16 %v536, %v534
        %v555 = vpack.c.bf16 %v539, %v537
        %v556 = vpack.c.bf16 %v540, %v538
        %v557 = vld [vmem:[%s263] sm:$0xff]
        %v558 = vld [vmem:[%s263 + $0x8] sm:$0xff]
        %v559 = vld [vmem:[%s263 + $0x10] sm:$0xff]
        %v560 = vld [vmem:[%s263 + $0x18] sm:$0xff]
        %v561 = vld [vmem:[%s263 + $0x20] sm:$0xff]
        %v562 = vld [vmem:[%s263 + $0x28] sm:$0xff]
        %v563 = vld [vmem:[%s263 + $0x30] sm:$0xff]
        %v564 = vld [vmem:[%s263 + $0x38] sm:$0xff]
        %v565 = vld [vmem:[%s263 + $0x40] sm:$0xff]
        %v566 = vld [vmem:[%s263 + $0x48] sm:$0xff]
        %v567 = vld [vmem:[%s263 + $0x50] sm:$0xff]
        %v568 = vld [vmem:[%s263 + $0x58] sm:$0xff]
        %v569 = vld [vmem:[%s263 + $0x60] sm:$0xff]
        %v570 = vld [vmem:[%s263 + $0x68] sm:$0xff]
        %v571 = vld [vmem:[%s263 + $0x70] sm:$0xff]
        %v572 = vld [vmem:[%s263 + $0x78] sm:$0xff]
        %v573 = vld [vmem:[%s263 + $0x80] sm:$0xff]
        %v574 = vld [vmem:[%s263 + $0x88] sm:$0xff]
        %v575 = vld [vmem:[%s263 + $0x90] sm:$0xff]
        %v576 = vld [vmem:[%s263 + $0x98] sm:$0xff]
        %v577 = vld [vmem:[%s263 + $0xa0] sm:$0xff]
        %v578 = vld [vmem:[%s263 + $0xa8] sm:$0xff]
        %v579 = vld [vmem:[%s263 + $0xb0] sm:$0xff]
        %v580 = vld [vmem:[%s263 + $0xb8] sm:$0xff]
        %v581 = vld [vmem:[%s263 + $0xc0] sm:$0xff]
        %v582 = vld [vmem:[%s263 + $0xc8] sm:$0xff]
        %v583 = vld [vmem:[%s263 + $0xd0] sm:$0xff]
        %v584 = vld [vmem:[%s263 + $0xd8] sm:$0xff]
        %v585 = vld [vmem:[%s263 + $0xe0] sm:$0xff]
        %v586 = vld [vmem:[%s263 + $0xe8] sm:$0xff]
        %v587 = vld [vmem:[%s263 + $0xf0] sm:$0xff]
        %v588 = vld [vmem:[%s263 + $0xf8] sm:$0xff]
        %s589 = sld [smem:[#allocation2 + $0x2]]
        %s590 = sld [smem:[#allocation2 + $0x3]]
        %v591 = vstv %s589
        %v592 = vrcp.pop %v591
        %v593 = vmul.f32 %v591, %v592
        %v594 = vsub.f32 1.0, %v593
        %v595 = vmul.f32 %v592, %v594
        %v596 = vadd.f32 %v592, %v595
        %vm597 = vweird.f32 %v591
        %vm598 = vweird.f32 %v592
        %vm599 = vmor %vm597, %vm598
        %v600 = vsel %vm599, %v592, %v596
        %v601 = vand.u32 2147483647, %v591
        %vm602 = vcmp.eq.f32.partialorder %v601, 8.507059e+37
        %v603 = vand.u32 %v591, 2147483648
        %v604 = vor.u32 1.1754944e-38, %v603
        %v605 = vsel %vm602, %v604, %v600
        %s606 = vtos %v605
        %v607 = vstv %s606
        %v608 = vmul.f32 %v557, %v607
        %v609 = vmul.f32 %v558, %v607
        %v610 = vmul.f32 %v559, %v607
        %v611 = vmul.f32 %v560, %v607
        %v612 = vmul.f32 %v561, %v607
        %v613 = vmul.f32 %v562, %v607
        %v614 = vmul.f32 %v563, %v607
        %v615 = vmul.f32 %v564, %v607
        %v616 = vmul.f32 %v565, %v607
        %v617 = vmul.f32 %v566, %v607
        %v618 = vmul.f32 %v567, %v607
        %v619 = vmul.f32 %v568, %v607
        %v620 = vmul.f32 %v569, %v607
        %v621 = vmul.f32 %v570, %v607
        %v622 = vmul.f32 %v571, %v607
        %v623 = vmul.f32 %v572, %v607
        %v624 = vmul.f32 %v573, %v607
        %v625 = vmul.f32 %v574, %v607
        %v626 = vmul.f32 %v575, %v607
        %v627 = vmul.f32 %v576, %v607
        %v628 = vmul.f32 %v577, %v607
        %v629 = vmul.f32 %v578, %v607
        %v630 = vmul.f32 %v579, %v607
        %v631 = vmul.f32 %v580, %v607
        %v632 = vmul.f32 %v581, %v607
        %v633 = vmul.f32 %v582, %v607
        %v634 = vmul.f32 %v583, %v607
        %v635 = vmul.f32 %v584, %v607
        %v636 = vmul.f32 %v585, %v607
        %v637 = vmul.f32 %v586, %v607
        %v638 = vmul.f32 %v587, %v607
        %v639 = vmul.f32 %v588, %v607
        %v640 = vround.ne.pseudo %v608
        %v641 = vround.ne.pseudo %v609
        %v642 = vround.ne.pseudo %v610
        %v643 = vround.ne.pseudo %v611
        %v644 = vround.ne.pseudo %v612
        %v645 = vround.ne.pseudo %v613
        %v646 = vround.ne.pseudo %v614
        %v647 = vround.ne.pseudo %v615
        %v648 = vround.ne.pseudo %v616
        %v649 = vround.ne.pseudo %v617
        %v650 = vround.ne.pseudo %v618
        %v651 = vround.ne.pseudo %v619
        %v652 = vround.ne.pseudo %v620
        %v653 = vround.ne.pseudo %v621
        %v654 = vround.ne.pseudo %v622
        %v655 = vround.ne.pseudo %v623
        %v656 = vround.ne.pseudo %v624
        %v657 = vround.ne.pseudo %v625
        %v658 = vround.ne.pseudo %v626
        %v659 = vround.ne.pseudo %v627
        %v660 = vround.ne.pseudo %v628
        %v661 = vround.ne.pseudo %v629
        %v662 = vround.ne.pseudo %v630
        %v663 = vround.ne.pseudo %v631
        %v664 = vround.ne.pseudo %v632
        %v665 = vround.ne.pseudo %v633
        %v666 = vround.ne.pseudo %v634
        %v667 = vround.ne.pseudo %v635
        %v668 = vround.ne.pseudo %v636
        %v669 = vround.ne.pseudo %v637
        %v670 = vround.ne.pseudo %v638
        %v671 = vround.ne.pseudo %v639
        %v672 = vstv %s590
        %v673 = vadd.f32 %v640, %v672
        %v674 = vadd.f32 %v641, %v672
        %v675 = vadd.f32 %v642, %v672
        %v676 = vadd.f32 %v643, %v672
        %v677 = vadd.f32 %v644, %v672
        %v678 = vadd.f32 %v645, %v672
        %v679 = vadd.f32 %v646, %v672
        %v680 = vadd.f32 %v647, %v672
        %v681 = vadd.f32 %v648, %v672
        %v682 = vadd.f32 %v649, %v672
        %v683 = vadd.f32 %v650, %v672
        %v684 = vadd.f32 %v651, %v672
        %v685 = vadd.f32 %v652, %v672
        %v686 = vadd.f32 %v653, %v672
        %v687 = vadd.f32 %v654, %v672
        %v688 = vadd.f32 %v655, %v672
        %v689 = vadd.f32 %v656, %v672
        %v690 = vadd.f32 %v657, %v672
        %v691 = vadd.f32 %v658, %v672
        %v692 = vadd.f32 %v659, %v672
        %v693 = vadd.f32 %v660, %v672
        %v694 = vadd.f32 %v661, %v672
        %v695 = vadd.f32 %v662, %v672
        %v696 = vadd.f32 %v663, %v672
        %v697 = vadd.f32 %v664, %v672
        %v698 = vadd.f32 %v665, %v672
        %v699 = vadd.f32 %v666, %v672
        %v700 = vadd.f32 %v667, %v672
        %v701 = vadd.f32 %v668, %v672
        %v702 = vadd.f32 %v669, %v672
        %v703 = vadd.f32 %v670, %v672
        %v704 = vadd.f32 %v671, %v672
        %v705 = vmax.f32 %v673, 0.0
        %v706 = vmax.f32 %v674, 0.0
        %v707 = vmax.f32 %v675, 0.0
        %v708 = vmax.f32 %v676, 0.0
        %v709 = vmax.f32 %v677, 0.0
        %v710 = vmax.f32 %v678, 0.0
        %v711 = vmax.f32 %v679, 0.0
        %v712 = vmax.f32 %v680, 0.0
        %v713 = vmax.f32 %v681, 0.0
        %v714 = vmax.f32 %v682, 0.0
        %v715 = vmax.f32 %v683, 0.0
        %v716 = vmax.f32 %v684, 0.0
        %v717 = vmax.f32 %v685, 0.0
        %v718 = vmax.f32 %v686, 0.0
        %v719 = vmax.f32 %v687, 0.0
        %v720 = vmax.f32 %v688, 0.0
        %v721 = vmax.f32 %v689, 0.0
        %v722 = vmax.f32 %v690, 0.0
        %v723 = vmax.f32 %v691, 0.0
        %v724 = vmax.f32 %v692, 0.0
        %v725 = vmax.f32 %v693, 0.0
        %v726 = vmax.f32 %v694, 0.0
        %v727 = vmax.f32 %v695, 0.0
        %v728 = vmax.f32 %v696, 0.0
        %v729 = vmax.f32 %v697, 0.0
        %v730 = vmax.f32 %v698, 0.0
        %v731 = vmax.f32 %v699, 0.0
        %v732 = vmax.f32 %v700, 0.0
        %v733 = vmax.f32 %v701, 0.0
        %v734 = vmax.f32 %v702, 0.0
        %v735 = vmax.f32 %v703, 0.0
        %v736 = vmax.f32 %v704, 0.0
        %v737 = vmin.f32 %v705, 255.0
        %v738 = vmin.f32 %v706, 255.0
        %v739 = vmin.f32 %v707, 255.0
        %v740 = vmin.f32 %v708, 255.0
        %v741 = vmin.f32 %v709, 255.0
        %v742 = vmin.f32 %v710, 255.0
        %v743 = vmin.f32 %v711, 255.0
        %v744 = vmin.f32 %v712, 255.0
        %v745 = vmin.f32 %v713, 255.0
        %v746 = vmin.f32 %v714, 255.0
        %v747 = vmin.f32 %v715, 255.0
        %v748 = vmin.f32 %v716, 255.0
        %v749 = vmin.f32 %v717, 255.0
        %v750 = vmin.f32 %v718, 255.0
        %v751 = vmin.f32 %v719, 255.0
        %v752 = vmin.f32 %v720, 255.0
        %v753 = vmin.f32 %v721, 255.0
        %v754 = vmin.f32 %v722, 255.0
        %v755 = vmin.f32 %v723, 255.0
        %v756 = vmin.f32 %v724, 255.0
        %v757 = vmin.f32 %v725, 255.0
        %v758 = vmin.f32 %v726, 255.0
        %v759 = vmin.f32 %v727, 255.0
        %v760 = vmin.f32 %v728, 255.0
        %v761 = vmin.f32 %v729, 255.0
        %v762 = vmin.f32 %v730, 255.0
        %v763 = vmin.f32 %v731, 255.0
        %v764 = vmin.f32 %v732, 255.0
        %v765 = vmin.f32 %v733, 255.0
        %v766 = vmin.f32 %v734, 255.0
        %v767 = vmin.f32 %v735, 255.0
        %v768 = vmin.f32 %v736, 255.0
        %v769 = vsub.f32 %v737, %v672
        %v770 = vsub.f32 %v738, %v672
        %v771 = vsub.f32 %v739, %v672
        %v772 = vsub.f32 %v740, %v672
        %v773 = vsub.f32 %v741, %v672
        %v774 = vsub.f32 %v742, %v672
        %v775 = vsub.f32 %v743, %v672
        %v776 = vsub.f32 %v744, %v672
        %v777 = vsub.f32 %v745, %v672
        %v778 = vsub.f32 %v746, %v672
        %v779 = vsub.f32 %v747, %v672
        %v780 = vsub.f32 %v748, %v672
        %v781 = vsub.f32 %v749, %v672
        %v782 = vsub.f32 %v750, %v672
        %v783 = vsub.f32 %v751, %v672
        %v784 = vsub.f32 %v752, %v672
        %v785 = vsub.f32 %v753, %v672
        %v786 = vsub.f32 %v754, %v672
        %v787 = vsub.f32 %v755, %v672
        %v788 = vsub.f32 %v756, %v672
        %v789 = vsub.f32 %v757, %v672
        %v790 = vsub.f32 %v758, %v672
        %v791 = vsub.f32 %v759, %v672
        %v792 = vsub.f32 %v760, %v672
        %v793 = vsub.f32 %v761, %v672
        %v794 = vsub.f32 %v762, %v672
        %v795 = vsub.f32 %v763, %v672
        %v796 = vsub.f32 %v764, %v672
        %v797 = vsub.f32 %v765, %v672
        %v798 = vsub.f32 %v766, %v672
        %v799 = vsub.f32 %v767, %v672
        %v800 = vsub.f32 %v768, %v672
        %v801 = vpack.c.bf16 %v770, %v769
        %v802 = vpack.c.bf16 %v772, %v771
        %v803 = vpack.c.bf16 %v774, %v773
        %v804 = vpack.c.bf16 %v776, %v775
        %v805 = vpack.c.bf16 %v778, %v777
        %v806 = vpack.c.bf16 %v780, %v779
        %v807 = vpack.c.bf16 %v782, %v781
        %v808 = vpack.c.bf16 %v784, %v783
        %v809 = vpack.c.bf16 %v786, %v785
        %v810 = vpack.c.bf16 %v788, %v787
        %v811 = vpack.c.bf16 %v790, %v789
        %v812 = vpack.c.bf16 %v792, %v791
        %v813 = vpack.c.bf16 %v794, %v793
        %v814 = vpack.c.bf16 %v796, %v795
        %v815 = vpack.c.bf16 %v798, %v797
        %v816 = vpack.c.bf16 %v800, %v799
        %p817 = scmp.eq.s32.totalorder %s33, 0
        // Predicated region
        $region45: #{tpu_custom_call.1} parent=31 // pred_check
          %p818 = pneg %p817
        $region46: #{tpu_custom_call.1} parent=31 // pred_check_branch
          %820 = sbr.rel (%p818) target = $region48
        $region47: #{tpu_custom_call.1} parent=31 // pred_region
          %821 = vst [vmem:[%s292] sm:$0xff] 0.0
          %822 = vst [vmem:[%s292 + $0x8] sm:$0xff] 0.0
          %823 = vst [vmem:[%s292 + $0x10] sm:$0xff] 0.0
          %824 = vst [vmem:[%s292 + $0x18] sm:$0xff] 0.0
          %825 = vst [vmem:[%s292 + $0x20] sm:$0xff] 0.0
          %826 = vst [vmem:[%s292 + $0x28] sm:$0xff] 0.0
          %827 = vst [vmem:[%s292 + $0x30] sm:$0xff] 0.0
          %828 = vst [vmem:[%s292 + $0x38] sm:$0xff] 0.0
          %829 = vst [vmem:[%s292 + $0x40] sm:$0xff] 0.0
          %830 = vst [vmem:[%s292 + $0x48] sm:$0xff] 0.0
          %831 = vst [vmem:[%s292 + $0x50] sm:$0xff] 0.0
          %832 = vst [vmem:[%s292 + $0x58] sm:$0xff] 0.0
          %833 = vst [vmem:[%s292 + $0x60] sm:$0xff] 0.0
          %834 = vst [vmem:[%s292 + $0x68] sm:$0xff] 0.0
          %835 = vst [vmem:[%s292 + $0x70] sm:$0xff] 0.0
          %836 = vst [vmem:[%s292 + $0x78] sm:$0xff] 0.0
        $region48: #{tpu_custom_call.1} parent=31 // pred_fallthru
          _
        %v837 = vld [vmem:[%s292] sm:$0xff]
        %v838 = vld [vmem:[%s292 + $0x8] sm:$0xff]
        %v839 = vld [vmem:[%s292 + $0x10] sm:$0xff]
        %v840 = vld [vmem:[%s292 + $0x18] sm:$0xff]
        %v841 = vld [vmem:[%s292 + $0x20] sm:$0xff]
        %v842 = vld [vmem:[%s292 + $0x28] sm:$0xff]
        %v843 = vld [vmem:[%s292 + $0x30] sm:$0xff]
        %v844 = vld [vmem:[%s292 + $0x38] sm:$0xff]
        %v845 = vld [vmem:[%s292 + $0x40] sm:$0xff]
        %v846 = vld [vmem:[%s292 + $0x48] sm:$0xff]
        %v847 = vld [vmem:[%s292 + $0x50] sm:$0xff]
        %v848 = vld [vmem:[%s292 + $0x58] sm:$0xff]
        %v849 = vld [vmem:[%s292 + $0x60] sm:$0xff]
        %v850 = vld [vmem:[%s292 + $0x68] sm:$0xff]
        %v851 = vld [vmem:[%s292 + $0x70] sm:$0xff]
        %v852 = vld [vmem:[%s292 + $0x78] sm:$0xff]
        %853 = vmatpush.bf16.msra.mxu0 %v808
        %854 = vmatpush.bf16.msra.mxu0 %v807
        %855 = vmatpush.bf16.msra.mxu0 %v806
        %856 = vmatpush.bf16.msra.mxu0 %v805
        %857 = vmatpush.bf16.msra.mxu0 %v804
        %858 = vmatpush.bf16.msra.mxu0 %v803
        %859 = vmatpush.bf16.msra.mxu0 %v802
        %860 = vmatpush.bf16.msra.mxu0 %v801
        %861 = vmatmul.bf16.gmra.mxu0 %v541
        %v862 = vpop.f32.mrf.mxu0
        %v863 = vadd.f32 0.0, %v862
        %v864 = vpop.f32.mrf.mxu0
        %v865 = vadd.f32 0.0, %v864
        %866 = vmatmul.bf16.gmra.mxu0 %v543
        %v867 = vpop.f32.mrf.mxu0
        %v868 = vadd.f32 0.0, %v867
        %v869 = vpop.f32.mrf.mxu0
        %v870 = vadd.f32 0.0, %v869
        %871 = vmatmul.bf16.gmra.mxu0 %v545
        %v872 = vpop.f32.mrf.mxu0
        %v873 = vadd.f32 0.0, %v872
        %v874 = vpop.f32.mrf.mxu0
        %v875 = vadd.f32 0.0, %v874
        %876 = vmatmul.bf16.gmra.mxu0 %v547
        %v877 = vpop.f32.mrf.mxu0
        %v878 = vadd.f32 0.0, %v877
        %v879 = vpop.f32.mrf.mxu0
        %v880 = vadd.f32 0.0, %v879
        %881 = vmatmul.bf16.gmra.mxu0 %v549
        %v882 = vpop.f32.mrf.mxu0
        %v883 = vadd.f32 0.0, %v882
        %v884 = vpop.f32.mrf.mxu0
        %v885 = vadd.f32 0.0, %v884
        %886 = vmatmul.bf16.gmra.mxu0 %v551
        %v887 = vpop.f32.mrf.mxu0
        %v888 = vadd.f32 0.0, %v887
        %v889 = vpop.f32.mrf.mxu0
        %v890 = vadd.f32 0.0, %v889
        %891 = vmatmul.bf16.gmra.mxu0 %v553
        %v892 = vpop.f32.mrf.mxu0
        %v893 = vadd.f32 0.0, %v892
        %v894 = vpop.f32.mrf.mxu0
        %v895 = vadd.f32 0.0, %v894
        %896 = vmatmul.bf16.gmra.mxu0 %v555
        %v897 = vpop.f32.mrf.mxu0
        %v898 = vadd.f32 0.0, %v897
        %v899 = vpop.f32.mrf.mxu0
        %v900 = vadd.f32 0.0, %v899
        %901 = vdwg.mxu0
        %902 = vmatpush.bf16.msra.mxu0 %v816
        %903 = vmatpush.bf16.msra.mxu0 %v815
        %904 = vmatpush.bf16.msra.mxu0 %v814
        %905 = vmatpush.bf16.msra.mxu0 %v813
        %906 = vmatpush.bf16.msra.mxu0 %v812
        %907 = vmatpush.bf16.msra.mxu0 %v811
        %908 = vmatpush.bf16.msra.mxu0 %v810
        %909 = vmatpush.bf16.msra.mxu0 %v809
        %910 = vmatmul.bf16.gmra.mxu0 %v542
        %v911 = vpop.f32.mrf.mxu0
        %v912 = vadd.f32 %v863, %v911
        %v913 = vpop.f32.mrf.mxu0
        %v914 = vadd.f32 %v865, %v913
        %915 = vmatmul.bf16.gmra.mxu0 %v544
        %v916 = vpop.f32.mrf.mxu0
        %v917 = vadd.f32 %v868, %v916
        %v918 = vpop.f32.mrf.mxu0
        %v919 = vadd.f32 %v870, %v918
        %920 = vmatmul.bf16.gmra.mxu0 %v546
        %v921 = vpop.f32.mrf.mxu0
        %v922 = vadd.f32 %v873, %v921
        %v923 = vpop.f32.mrf.mxu0
        %v924 = vadd.f32 %v875, %v923
        %925 = vmatmul.bf16.gmra.mxu0 %v548
        %v926 = vpop.f32.mrf.mxu0
        %v927 = vadd.f32 %v878, %v926
        %v928 = vpop.f32.mrf.mxu0
        %v929 = vadd.f32 %v880, %v928
        %930 = vmatmul.bf16.gmra.mxu0 %v550
        %v931 = vpop.f32.mrf.mxu0
        %v932 = vadd.f32 %v883, %v931
        %v933 = vpop.f32.mrf.mxu0
        %v934 = vadd.f32 %v885, %v933
        %935 = vmatmul.bf16.gmra.mxu0 %v552
        %v936 = vpop.f32.mrf.mxu0
        %v937 = vadd.f32 %v888, %v936
        %v938 = vpop.f32.mrf.mxu0
        %v939 = vadd.f32 %v890, %v938
        %940 = vmatmul.bf16.gmra.mxu0 %v554
        %v941 = vpop.f32.mrf.mxu0
        %v942 = vadd.f32 %v893, %v941
        %v943 = vpop.f32.mrf.mxu0
        %v944 = vadd.f32 %v895, %v943
        %945 = vmatmul.bf16.gmra.mxu0 %v556
        %v946 = vpop.f32.mrf.mxu0
        %v947 = vadd.f32 %v898, %v946
        %v948 = vpop.f32.mrf.mxu0
        %v949 = vadd.f32 %v900, %v948
        %950 = vdwg.mxu0
        %v951 = vadd.f32 %v837, %v912
        %v952 = vadd.f32 %v838, %v914
        %v953 = vadd.f32 %v839, %v917
        %v954 = vadd.f32 %v840, %v919
        %v955 = vadd.f32 %v841, %v922
        %v956 = vadd.f32 %v842, %v924
        %v957 = vadd.f32 %v843, %v927
        %v958 = vadd.f32 %v844, %v929
        %v959 = vadd.f32 %v845, %v932
        %v960 = vadd.f32 %v846, %v934
        %v961 = vadd.f32 %v847, %v937
        %v962 = vadd.f32 %v848, %v939
        %v963 = vadd.f32 %v849, %v942
        %v964 = vadd.f32 %v850, %v944
        %v965 = vadd.f32 %v851, %v947
        %v966 = vadd.f32 %v852, %v949
        %967 = vst [vmem:[%s292] sm:$0xff] %v951
        %968 = vst [vmem:[%s292 + $0x8] sm:$0xff] %v952
        %969 = vst [vmem:[%s292 + $0x10] sm:$0xff] %v953
        %970 = vst [vmem:[%s292 + $0x18] sm:$0xff] %v954
        %971 = vst [vmem:[%s292 + $0x20] sm:$0xff] %v955
        %972 = vst [vmem:[%s292 + $0x28] sm:$0xff] %v956
        %973 = vst [vmem:[%s292 + $0x30] sm:$0xff] %v957
        %974 = vst [vmem:[%s292 + $0x38] sm:$0xff] %v958
        %975 = vst [vmem:[%s292 + $0x40] sm:$0xff] %v959
        %976 = vst [vmem:[%s292 + $0x48] sm:$0xff] %v960
        %977 = vst [vmem:[%s292 + $0x50] sm:$0xff] %v961
        %978 = vst [vmem:[%s292 + $0x58] sm:$0xff] %v962
        %979 = vst [vmem:[%s292 + $0x60] sm:$0xff] %v963
        %980 = vst [vmem:[%s292 + $0x68] sm:$0xff] %v964
        %981 = vst [vmem:[%s292 + $0x70] sm:$0xff] %v965
        %982 = vst [vmem:[%s292 + $0x78] sm:$0xff] %v966
        // Predicated region
        $region49: #{tpu_custom_call.1} parent=31 // pred_check
          %p983 = pneg %p817
        $region50: #{tpu_custom_call.1} parent=31 // pred_check_branch
          %985 = sbr.rel (%p983) target = $region52
        $region51: #{tpu_custom_call.1} parent=31 // pred_region
          %v986 = vld [vmem:[%s292] sm:$0xff]
          %v987 = vld [vmem:[%s292 + $0x8] sm:$0xff]
          %v988 = vld [vmem:[%s292 + $0x10] sm:$0xff]
          %v989 = vld [vmem:[%s292 + $0x18] sm:$0xff]
          %v990 = vld [vmem:[%s292 + $0x20] sm:$0xff]
          %v991 = vld [vmem:[%s292 + $0x28] sm:$0xff]
          %v992 = vld [vmem:[%s292 + $0x30] sm:$0xff]
          %v993 = vld [vmem:[%s292 + $0x38] sm:$0xff]
          %v994 = vld [vmem:[%s292 + $0x40] sm:$0xff]
          %v995 = vld [vmem:[%s292 + $0x48] sm:$0xff]
          %v996 = vld [vmem:[%s292 + $0x50] sm:$0xff]
          %v997 = vld [vmem:[%s292 + $0x58] sm:$0xff]
          %v998 = vld [vmem:[%s292 + $0x60] sm:$0xff]
          %v999 = vld [vmem:[%s292 + $0x68] sm:$0xff]
          %v1000 = vld [vmem:[%s292 + $0x70] sm:$0xff]
          %v1001 = vld [vmem:[%s292 + $0x78] sm:$0xff]
          %s1002 = sld [smem:[#allocation2]]
          %s1003 = sld [smem:[#allocation2 + $0x2]]
          %s1004 = smul.f32 %s1002, %s1003
          %v1005 = vstv %s1004
          %v1006 = vmul.f32 %v986, %v1005
          %v1007 = vmul.f32 %v987, %v1005
          %v1008 = vmul.f32 %v988, %v1005
          %v1009 = vmul.f32 %v989, %v1005
          %v1010 = vmul.f32 %v990, %v1005
          %v1011 = vmul.f32 %v991, %v1005
          %v1012 = vmul.f32 %v992, %v1005
          %v1013 = vmul.f32 %v993, %v1005
          %v1014 = vmul.f32 %v994, %v1005
          %v1015 = vmul.f32 %v995, %v1005
          %v1016 = vmul.f32 %v996, %v1005
          %v1017 = vmul.f32 %v997, %v1005
          %v1018 = vmul.f32 %v998, %v1005
          %v1019 = vmul.f32 %v999, %v1005
          %v1020 = vmul.f32 %v1000, %v1005
          %v1021 = vmul.f32 %v1001, %v1005
          %1022 = vst [vmem:[%s292] sm:$0xff] %v1006
          %1023 = vst [vmem:[%s292 + $0x8] sm:$0xff] %v1007
          %1024 = vst [vmem:[%s292 + $0x10] sm:$0xff] %v1008
          %1025 = vst [vmem:[%s292 + $0x18] sm:$0xff] %v1009
          %1026 = vst [vmem:[%s292 + $0x20] sm:$0xff] %v1010
          %1027 = vst [vmem:[%s292 + $0x28] sm:$0xff] %v1011
          %1028 = vst [vmem:[%s292 + $0x30] sm:$0xff] %v1012
          %1029 = vst [vmem:[%s292 + $0x38] sm:$0xff] %v1013
          %1030 = vst [vmem:[%s292 + $0x40] sm:$0xff] %v1014
          %1031 = vst [vmem:[%s292 + $0x48] sm:$0xff] %v1015
          %1032 = vst [vmem:[%s292 + $0x50] sm:$0xff] %v1016
          %1033 = vst [vmem:[%s292 + $0x58] sm:$0xff] %v1017
          %1034 = vst [vmem:[%s292 + $0x60] sm:$0xff] %v1018
          %1035 = vst [vmem:[%s292 + $0x68] sm:$0xff] %v1019
          %1036 = vst [vmem:[%s292 + $0x70] sm:$0xff] %v1020
          %1037 = vst [vmem:[%s292 + $0x78] sm:$0xff] %v1021
        $region52: #{tpu_custom_call.1} parent=31 // pred_fallthru
          _
        %s1038 = sand.u32 %s143, 1
        %s1039 = scalar_lea.sflag [#allocation4], %s1038
        %s1040 = sand.u32 %s143, 1
        %s1041 = smul.addr %s1040, 128
        %s1042 = scalar_lea.vmem [#allocation9], %s1041
        // Predicated region
        $region53: #{tpu_custom_call.1} parent=31 // pred_check
          %p1043 = pneg %p153
        $region54: #{tpu_custom_call.1} parent=31 // pred_check_branch
          %1045 = sbr.rel (%p1043) target = $region56
        $region55: #{tpu_custom_call.1} parent=31 // pred_region
          %s1046 = smul.u32 16, %s31
          %1048 = vsyncadd %s1039, 0
          %s1049 = sadd.s32 %s32, %s1046
          %s1050 = smul.addr %s30, 16
          %s1051 = sadd.s32 %s1049, %s1050
          %s1052 = smul.addr %s1051, 8
          %s1053 = scalar_lea.hbm %s3, %s1052
          %s1054 = sshll.u32 %s1042, 4
          %s1055 = int_to_ptr.vmem [resolvable:$true] %s1054
          %s1056 = sshll.u32 %s1053, 4
          %s1057 = int_to_ptr.hbm [resolvable:$true] %s1056
          %1062 = dma.vmem_to_hbm [thread:$0]  %s1055, 2048, %s1057, %s1039, 128, 128, 8
        $region56: #{tpu_custom_call.1} parent=31 // pred_fallthru
          _
      $region32: #{tpu_custom_call.1} parent=5 // pred_fallthru
        _
      %p1063 = scmp.le.s32.totalorder 2, %s19
      // Predicated region
      $region57: #{tpu_custom_call.1} parent=5 // pred_check
        %p1064 = pneg %p1063
      $region58: #{tpu_custom_call.1} parent=5 // pred_check_branch
        %1066 = sbr.rel (%p1064) target = $region60
      $region59: #{tpu_custom_call.1} parent=5 // pred_region
        %s1067 = ssub.s32 %s19, 2
        // Predicated region
        $region61: #{tpu_custom_call.1} parent=59 // pred_check
          %p1068 = pneg %p159
        $region62: #{tpu_custom_call.1} parent=59 // pred_check_branch
          %1070 = sbr.rel (%p1068) target = $region64
        $region63: #{tpu_custom_call.1} parent=59 // pred_region
          %s1071 = sand.u32 %s144, 1
          %s1072 = scalar_lea.sflag [#allocation4], %s1071
          %s1073 = sand.u32 %s144, 1
          %s1074 = smul.addr %s1073, 128
          %s1075 = scalar_lea.vmem [#allocation9], %s1074
          %1077 = dma.done %s1072, 2048
        $region64: #{tpu_custom_call.1} parent=59 // pred_fallthru
          _
      $region60: #{tpu_custom_call.1} parent=5 // pred_fallthru
        _
    $region6: #{tpu_custom_call.1} parent=1 // loop_footer
      %s23 = sadd.s32 1, %s19
    $region7: #{tpu_custom_call.1} parent=1 // loop_footer_branch
      %18 = sbr.rel target = $region3
    $region8: #{tpu_custom_call.1} parent=1 // loop_exit
      _
    %1078 = vsyncpa [#allocation3], 1
    %s1079 = scalar_lea.sflag [#allocation3], 1
    %1080 = vsyncpa %s1079, 1
    %1081 = vsyncpa [#allocation8], 1
    %s1082 = scalar_lea.sflag [#allocation8], 1
    %1083 = vsyncpa %s1082, 1
    %1084 = vsyncpa [#allocation4], 1
    %s1085 = scalar_lea.sflag [#allocation4], 1
    %1086 = vsyncpa %s1085, 1
    %1087 = vsyncpa [#allocation5], 1
    %s1088 = scalar_lea.sflag [#allocation5], 1
    %1089 = vsyncpa %s1088, 1

</llo_original>
